<compile_context>
chip_gen: v7x
topology: tpu7x:2x2x1
jax: 0.10.0
libtpu: 0.0.40
codegen_flags: <defaults>
</compile_context>

<pallas_src>
import jax
import jax.numpy as jnp
from jax import lax
from jax.experimental import pallas as pl
from jax.experimental.pallas import tpu as pltpu  # noqa: F401  (kept for TPU backend parity)


# Packed-slab layout (single input → single DMA):
#   row 0     : x1   (1, 5)
#   row 1     : bias (1, 5)
#   rows 2..6 : W    (5, 5)   (nn.Linear weight: out_features x in_features)
def _linear_plus_weight_kernel(packed_ref, o_ref):
    p = packed_ref[...]                  # (7, 5) — one vector load
    x = p[0:1, :]                        # (1, 5)
    b = p[1:2, :]                        # (1, 5)
    w = p[2:7, :]                        # (5, 5)

    # x @ W^T via dimension numbers (contract last dim of both); no explicit .T
    s = lax.dot_general(
        x, w, (((1,), (1,)), ((), ())),
        preferred_element_type=jnp.float32,
    )                                    # (1, 5)

    # Single fused epilogue: (x @ W^T) + b broadcast-added to W  → one vst
    o_ref[...] = (s + b + w).astype(o_ref.dtype)  # (5, 5)


@jax.jit
def model_forward(x1, weight, bias):
    """x1: (1, 5) f32, weight: (5, 5) f32, bias: (5,) f32 -> (5, 5) f32."""
    # Pack all operands into one slab so the kernel has a single input DMA.
    packed = jnp.concatenate([x1, bias.reshape(1, -1), weight], axis=0)  # (7, 5)
    out_rows, out_cols = weight.shape
    return pl.pallas_call(
        _linear_plus_weight_kernel,
        out_shape=jax.ShapeDtypeStruct((out_rows, out_cols), jnp.float32),
        in_specs=[pl.BlockSpec(packed.shape, lambda: (0, 0))],   # full-array block
        out_specs=pl.BlockSpec((out_rows, out_cols), lambda: (0, 0)),
    )(packed)


if __name__ == "__main__":
    key = jax.random.PRNGKey(0)
    k_x, k_w, k_b = jax.random.split(key, 3)

    # Deterministic "parameters" for nn.Linear(5, 5)
    in_features, out_features = 5, 5
    bound = 1.0 / (in_features ** 0.5)
    weight = jax.random.uniform(
        k_w, (out_features, in_features), jnp.float32, -bound, bound)
    bias = jax.random.uniform(k_b, (out_features,), jnp.float32, -bound, bound)

    # Input matching torch.randn(1, 5)
    x1 = jax.random.normal(k_x, (1, in_features), jnp.float32)

    out = model_forward(x1, weight, bias)
    out = jax.block_until_ready(out)

    # Reference check in plain JAX
    ref = (x1 @ weight.T + bias[None, :]) + weight
    assert out.shape == (out_features, in_features)
    assert jnp.allclose(out, ref, atol=1e-5, rtol=1e-5)

    print("KERNEL_OK")
</pallas_src>

<mosaic_0001>
module attributes {stable_mosaic.version = 11 : i64} {
  func.func @_linear_plus_weight_kernel(%arg0: memref<7x5xf32, #tpu.memory_space<vmem>>, %arg1: memref<5x5xf32, #tpu.memory_space<vmem>>) attributes {dimension_semantics = [], scalar_prefetch = 0 : i64, scratch_operands = 0 : i64, tpu.core_type = #tpu.core_type<tc>} {
    %c0 = arith.constant 0 : index
    %c0_0 = arith.constant 0 : index
    %0 = vector.load %arg0[%c0, %c0_0] : memref<7x5xf32, #tpu.memory_space<vmem>>, vector<7x5xf32>
    %1 = vector.extract_strided_slice %0 {offsets = [0, 0], sizes = [1, 5], strides = [1, 1]} : vector<7x5xf32> to vector<1x5xf32>
    %2 = vector.extract_strided_slice %0 {offsets = [1, 0], sizes = [1, 5], strides = [1, 1]} : vector<7x5xf32> to vector<1x5xf32>
    %3 = vector.extract_strided_slice %0 {offsets = [2, 0], sizes = [5, 5], strides = [1, 1]} : vector<7x5xf32> to vector<5x5xf32>
    %cst = arith.constant dense<0.000000e+00> : vector<1x5xf32>
    %4 = tpu.matmul %1, %3, %cst {dimension_numbers = #tpu.dot_dimension_numbers<[1], [1], [0], [0], [0, 0, 1, 0], [], []>} : vector<1x5xf32>, vector<5x5xf32>, vector<1x5xf32> -> vector<1x5xf32>
    %5 = arith.addf %4, %2 : vector<1x5xf32>
    %6 = vector.broadcast %5 : vector<1x5xf32> to vector<5x5xf32>
    %7 = arith.addf %6, %3 : vector<5x5xf32>
    %c0_1 = arith.constant 0 : index
    %c0_2 = arith.constant 0 : index
    %8 = vector.load %arg1[%c0_1, %c0_2] : memref<5x5xf32, #tpu.memory_space<vmem>>, vector<5x5xf32>
    tpu.vector_store %arg1[%c0_1, %c0_2], %7 {strides = array<i32>} : memref<5x5xf32, #tpu.memory_space<vmem>>, vector<5x5xf32>,
    return
  }
}

</mosaic_0001>

<llo_original>
// kernel: model_forward.1
$region0: #{model_forward.1}
  #allocation0 [shape = 'u32[]', space=smem, size = 0x4, offset = 0x4, fixed_abs, tag = 'smem constant byte address 0x4 - core index']
  #allocation1 [shape = 'u32[144,128]{1,0:T(1,128)}', space=vmem, size = 0x12000, scoped, tag = 'internal scratch']
  %s0 = inlined_call_operand.vmem [shape: f32[7,5], index: 0, kind: input, shape index: {}]
  %s1 = inlined_call_operand.hbm [shape: f32[5,5], index: 1, kind: output, shape index: {}]
  %s2 = sld [smem:[#allocation0]]
  $region14: #{model_forward.1} parent=0
    _
  %s4 = ssub.s32 1, %s2
  %s5 = scalar_select 0, %s4, %s2
  $region1: #{model_forward.1} parent=0
    #allocation2 [shape = 'u8[4096]{0}', space=vmem, size = 0x1000, scoped, tag = 'output window, operand 0, single buffered']
    #allocation3 [shape = 's32[1]{0}', space=sflag, size = 0x4, scoped, tag = 'scoped memory for model_forward.1']
    %6 = vsyncpa [#allocation3], 0
    // Predicated region
    $region2: #{model_forward.1} parent=1 // pred_check
      _
    $region3: #{model_forward.1} parent=1 // pred_check_branch
      %8 = sbr.rel (0) target = $region5
    $region4: #{model_forward.1} parent=1 // pred_region
      _
    $region5: #{model_forward.1} parent=1 // pred_fallthru
      _
    %v9 = vld [vmem:[%s0] sm:$0x7f]
    %v11 = vrot.slane %v9, 2
    %v12 = vrot.slane %v9, 1
    %vm14 = vcmask 39936
    %v15 = vsel %vm14, %v9, 0
    %v17 = vsel %vm14, %v11, 0
    %19 = vmatprep.subr.mxu0 0.0
    %20 = vmatpush1.xpose.msra.mxu0 %v17
    %21 = vmatprep.subr.mxu0 0.0
    %22 = vmatpush1.xpose.msra.mxu0 0.0
    %23 = vmatprep.subr.mxu0 0.0
    %24 = vmatpush1.xpose.msra.mxu0 0.0
    %25 = vmatprep.subr.mxu0 0.0
    %26 = vmatpush1.xpose.msra.mxu0 0.0
    %27 = vmatprep.subr.mxu0 0.0
    %28 = vmatpush1.xpose.msra.mxu0 0.0
    %29 = vmatprep.subr.mxu0 0.0
    %30 = vmatpush1.xpose.msra.mxu0 0.0
    %31 = vmatprep.subr.mxu0 0.0
    %32 = vmatpush1.xpose.msra.mxu0 0.0
    %33 = vmatprep.subr.mxu0 0.0
    %34 = vmatpush1.xpose.msra.mxu0 0.0
    %35 = vmatprep.subr.mxu0 0.0
    %36 = vmatpush1.xpose.msra.mxu0 0.0
    %37 = vmatprep.subr.mxu0 0.0
    %38 = vmatpush1.xpose.msra.mxu0 0.0
    %39 = vmatprep.subr.mxu0 0.0
    %40 = vmatpush1.xpose.msra.mxu0 0.0
    %41 = vmatprep.subr.mxu0 0.0
    %42 = vmatpush1.xpose.msra.mxu0 0.0
    %43 = vmatprep.subr.mxu0 0.0
    %44 = vmatpush1.xpose.msra.mxu0 0.0
    %45 = vmatprep.subr.mxu0 0.0
    %46 = vmatpush1.xpose.msra.mxu0 0.0
    %47 = vmatprep.subr.mxu0 0.0
    %48 = vmatpush1.xpose.msra.mxu0 0.0
    %49 = vmatprep.subr.mxu0 0.0
    %50 = vmatpush1.xpose.msra.mxu0 0.0
    %51 = vmatprep.subr.mxu0 0.0
    %52 = vmatpush1.xpose.msra.mxu0 0.0
    %53 = vmatprep.subr.mxu0 0.0
    %54 = vmatpush1.xpose.msra.mxu0 0.0
    %55 = vmatprep.subr.mxu0 0.0
    %56 = vmatpush1.xpose.msra.mxu0 0.0
    %57 = vmatprep.subr.mxu0 0.0
    %58 = vmatpush1.xpose.msra.mxu0 0.0
    %59 = vmatprep.subr.mxu0 0.0
    %60 = vmatpush1.xpose.msra.mxu0 0.0
    %61 = vmatprep.subr.mxu0 0.0
    %62 = vmatpush1.xpose.msra.mxu0 0.0
    %63 = vmatprep.subr.mxu0 0.0
    %64 = vmatpush1.xpose.msra.mxu0 0.0
    %65 = vmatprep.subr.mxu0 0.0
    %66 = vmatpush1.xpose.msra.mxu0 0.0
    %67 = vmatprep.subr.mxu0 0.0
    %68 = vmatpush1.xpose.msra.mxu0 0.0
    %69 = vmatprep.subr.mxu0 0.0
    %70 = vmatpush1.xpose.msra.mxu0 0.0
    %71 = vmatprep.subr.mxu0 0.0
    %72 = vmatpush1.xpose.msra.mxu0 0.0
    %73 = vmatprep.subr.mxu0 0.0
    %74 = vmatpush1.xpose.msra.mxu0 0.0
    %75 = vmatprep.subr.mxu0 0.0
    %76 = vmatpush1.xpose.msra.mxu0 0.0
    %77 = vmatprep.subr.mxu0 0.0
    %78 = vmatpush1.xpose.msra.mxu0 0.0
    %79 = vmatprep.subr.mxu0 0.0
    %80 = vmatpush1.xpose.msra.mxu0 0.0
    %81 = vmatprep.subr.mxu0 0.0
    %82 = vmatpush1.xpose.msra.mxu0 0.0
    %83 = vmatprep.mubr.f32.mxu0 0.0
    %84 = vmatmul.mubr.f32.gmra.mrb[0].mxu0 %v15
    %v85 = vpop.f32.mrb[0].mxu0
    %v86 = vadd.f32 %v12, %v85
    %v87 = vpop.f32.mrb[0].mxu0
    %88 = vdwg.mxu0
    %v89 = vlaneseq
    %v90 = vshrl.u32 %v89, 7
    %v91 = vsub.s32 0, %v90
    %v92 = vrot.slane %v86, %v91
    %v93 = vadd.f32 %v92, %v9
    %vm94 = vcmask 38914
    %95 = vst.msk [vmem:[#allocation2 - $0x2] sm:$0x7c] %vm94, %v93
    // Predicated region
    $region6: #{model_forward.1} parent=1 // pred_check
      _
    $region7: #{model_forward.1} parent=1 // pred_check_branch
      %97 = sbr.rel (0) target = $region9
    $region8: #{model_forward.1} parent=1 // pred_region
      %s99 = ssub.s32 128, 128
      %100 = vsyncadd [#allocation3], %s99
      %s102 = sshll.u32 [#allocation2], 4
      %s103 = int_to_ptr.vmem [resolvable:$true] %s102
      %105 = dma.vmem_to_hbm [thread:$0]  %s103, 128, %s1, [#allocation3]
    $region9: #{model_forward.1} parent=1 // pred_fallthru
      _
    // Predicated region
    $region10: #{model_forward.1} parent=1 // pred_check
      _
    $region11: #{model_forward.1} parent=1 // pred_check_branch
      %107 = sbr.rel (0) target = $region13
    $region12: #{model_forward.1} parent=1 // pred_region
      %108 = dma.done [#allocation3], 128
    $region13: #{model_forward.1} parent=1 // pred_fallthru
      _
    %109 = vsyncpa [#allocation3], 1

</llo_original>
